<compile_context>
chip_gen: v7x
topology: tpu7x:2x2x1
jax: 0.10.0
libtpu: 0.0.40
codegen_flags: <defaults>
</compile_context>

<pallas_src>
import functools

import jax
import jax.numpy as jnp
from jax.experimental import pallas as pl
from jax.experimental.pallas import tpu as pltpu

CH_PER_SLICE = 60  # fixed by the reference module (torch.split(outputs, 60, dim=1))


def _round_up(x, m):
    return (x + m - 1) // m * m


def _rss_mip_kernel(x_ref, rss_ref, mip_ref, *, n_slice, sub_lanes):
    """One (batch, spatial-tile) block.

    x_ref  : (1, n_slice*60, t_hw)  input activations (any float dtype)
    rss_ref: (1, n_slice,    t_hw)  per-slice root-sum-of-squares
    mip_ref: (1, 1,          t_hw)  max-intensity projection over slices
    """
    t_hw = x_ref.shape[-1]
    n_sub = t_hw // sub_lanes
    n_full = CH_PER_SLICE // 8                 # 7 full 8-row chunks
    rem = CH_PER_SLICE - n_full * 8            # 4-row tail

    # Static lane-sub-tile loop: per-iteration working set is a handful of vregs
    # (xs + acc + two (1, sub) rows); results are stored immediately so nothing
    # stays live across sub-tiles -> no spill traffic, DMA tile stays large.
    for j in range(n_sub):
        off = j * sub_lanes
        mip_ssq = None
        for s in range(n_slice):
            base = s * CH_PER_SLICE
            # Sublane-sized (8, sub) chunks accumulated on the VPU.
            xs = x_ref[0, pl.ds(base, 8), pl.ds(off, sub_lanes)].astype(jnp.float32)
            acc = xs * xs
            for c in range(1, n_full):
                xs = x_ref[0, pl.ds(base + 8 * c, 8),
                           pl.ds(off, sub_lanes)].astype(jnp.float32)
                acc = acc + xs * xs
            # One cross-sublane reduce per slice (+ one small one for the tail).
            ssq = jnp.sum(acc, axis=0, keepdims=True)
            if rem:
                xt = x_ref[0, pl.ds(base + 8 * n_full, rem),
                           pl.ds(off, sub_lanes)].astype(jnp.float32)
                ssq = ssq + jnp.sum(xt * xt, axis=0, keepdims=True)
            # Write this slice's RSS row directly: no concatenate, short live range.
            rss_ref[0, pl.ds(s, 1), pl.ds(off, sub_lanes)] = (
                jnp.sqrt(ssq).astype(rss_ref.dtype))
            mip_ssq = ssq if mip_ssq is None else jnp.maximum(mip_ssq, ssq)
        # sqrt is monotone: max_s sqrt(ssq_s) == sqrt(max_s ssq_s)
        mip_ref[0, :, pl.ds(off, sub_lanes)] = jnp.sqrt(mip_ssq).astype(mip_ref.dtype)


def output_transform_multislice(outputs, n_slice=3, *, max_hw_tile=None, sub_tile=512):
    """Pallas equivalent of OutputTransform_multislice.forward.

    Args:
      outputs: (N, n_slice*60, H, W) float array (NCHW).
    Returns:
      (outputs, rss_stack (N, n_slice, H, W), mip (N, H, W))
    """
    N, C, H, W = outputs.shape
    assert C == n_slice * CH_PER_SLICE, "channel dim must be n_slice * 60"

    HW = H * W
    # Lane-dense layout: fuse H*W into the last (lane) axis (free view, no copy).
    x = outputs.reshape(N, C, HW)
    itemsize = outputs.dtype.itemsize

    if max_hw_tile is None:
        # ~32 KiB of lanes per channel row -> ~5.6 MiB input blocks regardless of
        # dtype (8192 lanes for f32, 16384 for bf16).
        max_hw_tile = (32 * 1024) // itemsize

    hw_tiles = pl.cdiv(HW, max_hw_tile)
    # Keep both v7x TensorCores busy even when N == 1.
    if N == 1 and hw_tiles == 1 and HW > 128:
        hw_tiles = 2
    t_hw = _round_up(pl.cdiv(HW, hw_tiles), 128)

    # Compute sub-tile: largest 128-multiple divisor of t_hw that is <= sub_tile.
    sub_lanes = 128
    for cand in range(min(t_hw, sub_tile), 127, -128):
        if t_hw % cand == 0:
            sub_lanes = cand
            break

    kernel = functools.partial(_rss_mip_kernel, n_slice=n_slice, sub_lanes=sub_lanes)

    # Double-buffered input blocks + small outputs; cap below physical VMEM with
    # headroom for compiler internal scratch (v7x physical VMEM is 64 MiB).
    in_block_bytes = C * t_hw * itemsize
    vmem_limit = int(min(48 << 20, max(16 << 20, 4 * in_block_bytes)))

    # NOTE: HW need not be a multiple of t_hw; the boundary block is partial and
    # Pallas masks its writeback (garbage lanes never reach HBM) -> no jnp.pad
    # (which would cost an extra full read+write pass over the input).
    rss_flat, mip_flat = pl.pallas_call(
        kernel,
        out_shape=(
            jax.ShapeDtypeStruct((N, n_slice, HW), outputs.dtype),
            jax.ShapeDtypeStruct((N, 1, HW), outputs.dtype),
        ),
        grid=(N, hw_tiles),
        in_specs=[pl.BlockSpec((1, C, t_hw), lambda n, t: (n, 0, t))],
        out_specs=(
            pl.BlockSpec((1, n_slice, t_hw), lambda n, t: (n, 0, t)),
            pl.BlockSpec((1, 1, t_hw), lambda n, t: (n, 0, t)),
        ),
        compiler_params=pltpu.CompilerParams(
            dimension_semantics=("parallel", "parallel"),
            vmem_limit_bytes=vmem_limit,
        ),
    )(x)

    rss_stack = rss_flat.reshape(N, n_slice, H, W)
    mip = mip_flat[:, 0, :].reshape(N, H, W)
    # `outputs` is returned unchanged, exactly like the PyTorch module.
    return outputs, rss_stack, mip


def _reference(outputs, n_slice=3):
    """Plain-JAX reference for correctness checking."""
    N, C, H, W = outputs.shape
    xr = outputs.reshape(N, n_slice, CH_PER_SLICE, H, W).astype(jnp.float32)
    rss = jnp.sqrt(jnp.sum(xr * xr, axis=2))       # (N, n_slice, H, W)
    mip = jnp.max(rss, axis=1)                     # (N, H, W)
    return outputs, rss.astype(outputs.dtype), mip.astype(outputs.dtype)


def _check(x, n_slice):
    out, rss_stack, mip = output_transform_multislice(x, n_slice=n_slice)
    out = jax.block_until_ready(out)
    rss_stack = jax.block_until_ready(rss_stack)
    mip = jax.block_until_ready(mip)

    ref_out, ref_rss, ref_mip = _reference(x, n_slice=n_slice)
    N, C, H, W = x.shape
    assert out.shape == (N, C, H, W)
    assert rss_stack.shape == (N, n_slice, H, W)
    assert mip.shape == (N, H, W)
    assert jnp.allclose(out, ref_out)
    assert jnp.allclose(rss_stack, ref_rss, atol=1e-5, rtol=1e-5)
    assert jnp.allclose(mip, ref_mip, atol=1e-5, rtol=1e-5)


if __name__ == "__main__":
    key = jax.random.PRNGKey(0)
    SLICE = 3

    k1, k2, k3 = jax.random.split(key, 3)

    # Small shape consistent with the module: 3 slices x 60 channels = 180 channels.
    x1 = jax.random.normal(k1, (2, SLICE * CH_PER_SLICE, 16, 16), dtype=jnp.float32)
    _check(x1, SLICE)

    # Non-128-multiple spatial size exercises the partial boundary-block path
    # (no wrapper pad) and the N==1 two-tile split.
    x2 = jax.random.normal(k2, (1, SLICE * CH_PER_SLICE, 12, 12), dtype=jnp.float32)
    _check(x2, SLICE)

    # Larger unaligned spatial size exercises multiple lane sub-tiles per block
    # plus a partial last block.
    x3 = jax.random.normal(k3, (1, SLICE * CH_PER_SLICE, 40, 40), dtype=jnp.float32)
    _check(x3, SLICE)

    print("KERNEL_OK")
</pallas_src>

<mosaic_0001>
module attributes {stable_mosaic.version = 11 : i64} {
  func.func @_rss_mip_kernel(%arg0: i32, %arg1: i32, %arg2: memref<1x180x256xf32, #tpu.memory_space<vmem>>, %arg3: memref<1x3x256xf32, #tpu.memory_space<vmem>>, %arg4: memref<1x1x256xf32, #tpu.memory_space<vmem>>) attributes {dimension_semantics = [#tpu.dimension_semantics<parallel>, #tpu.dimension_semantics<parallel>], iteration_bounds = array<i64: 2, 1>, scalar_prefetch = 0 : i64, scratch_operands = 0 : i64, tpu.core_type = #tpu.core_type<tc>, window_params = [{transform_indices = @transform_0, window_bounds = array<i64: 1, 180, 256>}, {transform_indices = @transform_1, window_bounds = array<i64: 1, 3, 256>}, {transform_indices = @transform_2, window_bounds = array<i64: 1, 1, 256>}]} {
    %c0 = arith.constant 0 : index
    %c0_0 = arith.constant 0 : index
    %c0_1 = arith.constant 0 : index
    %0 = vector.load %arg2[%c0, %c0_0, %c0_1] : memref<1x180x256xf32, #tpu.memory_space<vmem>>, vector<1x8x256xf32>
    %1 = vector.shape_cast %0 : vector<1x8x256xf32> to vector<8x256xf32>
    %2 = arith.mulf %1, %1 : vector<8x256xf32>
    %c0_2 = arith.constant 0 : index
    %c8 = arith.constant 8 : index
    %c0_3 = arith.constant 0 : index
    %3 = vector.load %arg2[%c0_2, %c8, %c0_3] : memref<1x180x256xf32, #tpu.memory_space<vmem>>, vector<1x8x256xf32>
    %4 = vector.shape_cast %3 : vector<1x8x256xf32> to vector<8x256xf32>
    %5 = arith.mulf %4, %4 : vector<8x256xf32>
    %6 = arith.addf %2, %5 : vector<8x256xf32>
    %c0_4 = arith.constant 0 : index
    %c16 = arith.constant 16 : index
    %c0_5 = arith.constant 0 : index
    %7 = vector.load %arg2[%c0_4, %c16, %c0_5] : memref<1x180x256xf32, #tpu.memory_space<vmem>>, vector<1x8x256xf32>
    %8 = vector.shape_cast %7 : vector<1x8x256xf32> to vector<8x256xf32>
    %9 = arith.mulf %8, %8 : vector<8x256xf32>
    %10 = arith.addf %6, %9 : vector<8x256xf32>
    %c0_6 = arith.constant 0 : index
    %c24 = arith.constant 24 : index
    %c0_7 = arith.constant 0 : index
    %11 = vector.load %arg2[%c0_6, %c24, %c0_7] : memref<1x180x256xf32, #tpu.memory_space<vmem>>, vector<1x8x256xf32>
    %12 = vector.shape_cast %11 : vector<1x8x256xf32> to vector<8x256xf32>
    %13 = arith.mulf %12, %12 : vector<8x256xf32>
    %14 = arith.addf %10, %13 : vector<8x256xf32>
    %c0_8 = arith.constant 0 : index
    %c32 = arith.constant 32 : index
    %c0_9 = arith.constant 0 : index
    %15 = vector.load %arg2[%c0_8, %c32, %c0_9] : memref<1x180x256xf32, #tpu.memory_space<vmem>>, vector<1x8x256xf32>
    %16 = vector.shape_cast %15 : vector<1x8x256xf32> to vector<8x256xf32>
    %17 = arith.mulf %16, %16 : vector<8x256xf32>
    %18 = arith.addf %14, %17 : vector<8x256xf32>
    %c0_10 = arith.constant 0 : index
    %c40 = arith.constant 40 : index
    %c0_11 = arith.constant 0 : index
    %19 = vector.load %arg2[%c0_10, %c40, %c0_11] : memref<1x180x256xf32, #tpu.memory_space<vmem>>, vector<1x8x256xf32>
    %20 = vector.shape_cast %19 : vector<1x8x256xf32> to vector<8x256xf32>
    %21 = arith.mulf %20, %20 : vector<8x256xf32>
    %22 = arith.addf %18, %21 : vector<8x256xf32>
    %c0_12 = arith.constant 0 : index
    %c48 = arith.constant 48 : index
    %c0_13 = arith.constant 0 : index
    %23 = vector.load %arg2[%c0_12, %c48, %c0_13] : memref<1x180x256xf32, #tpu.memory_space<vmem>>, vector<1x8x256xf32>
    %24 = vector.shape_cast %23 : vector<1x8x256xf32> to vector<8x256xf32>
    %25 = arith.mulf %24, %24 : vector<8x256xf32>
    %26 = arith.addf %22, %25 : vector<8x256xf32>
    %cst = arith.constant dense<0.000000e+00> : vector<256xf32>
    %27 = vector.multi_reduction <add>, %26, %cst [0] : vector<8x256xf32> to vector<256xf32>
    %28 = vector.shape_cast %27 : vector<256xf32> to vector<1x256xf32>
    %c0_14 = arith.constant 0 : index
    %c56 = arith.constant 56 : index
    %c0_15 = arith.constant 0 : index
    %29 = vector.load %arg2[%c0_14, %c56, %c0_15] : memref<1x180x256xf32, #tpu.memory_space<vmem>>, vector<1x4x256xf32>
    %30 = vector.shape_cast %29 : vector<1x4x256xf32> to vector<4x256xf32>
    %31 = arith.mulf %30, %30 : vector<4x256xf32>
    %cst_16 = arith.constant dense<0.000000e+00> : vector<256xf32>
    %32 = vector.multi_reduction <add>, %31, %cst_16 [0] : vector<4x256xf32> to vector<256xf32>
    %33 = vector.shape_cast %32 : vector<256xf32> to vector<1x256xf32>
    %34 = arith.addf %28, %33 : vector<1x256xf32>
    %35 = math.sqrt %34 : vector<1x256xf32>
    %c0_17 = arith.constant 0 : index
    %c0_18 = arith.constant 0 : index
    %c0_19 = arith.constant 0 : index
    %36 = vector.load %arg3[%c0_17, %c0_18, %c0_19] : memref<1x3x256xf32, #tpu.memory_space<vmem>>, vector<1x1x256xf32>
    %37 = vector.shape_cast %36 : vector<1x1x256xf32> to vector<1x256xf32>
    %38 = vector.shape_cast %35 : vector<1x256xf32> to vector<1x1x256xf32>
    tpu.vector_store %arg3[%c0_17, %c0_18, %c0_19], %38 {strides = array<i32>} : memref<1x3x256xf32, #tpu.memory_space<vmem>>, vector<1x1x256xf32>,
    %c0_20 = arith.constant 0 : index
    %c60 = arith.constant 60 : index
    %c0_21 = arith.constant 0 : index
    %39 = vector.load %arg2[%c0_20, %c60, %c0_21] : memref<1x180x256xf32, #tpu.memory_space<vmem>>, vector<1x8x256xf32>
    %40 = vector.shape_cast %39 : vector<1x8x256xf32> to vector<8x256xf32>
    %41 = arith.mulf %40, %40 : vector<8x256xf32>
    %c0_22 = arith.constant 0 : index
    %c68 = arith.constant 68 : index
    %c0_23 = arith.constant 0 : index
    %42 = vector.load %arg2[%c0_22, %c68, %c0_23] : memref<1x180x256xf32, #tpu.memory_space<vmem>>, vector<1x8x256xf32>
    %43 = vector.shape_cast %42 : vector<1x8x256xf32> to vector<8x256xf32>
    %44 = arith.mulf %43, %43 : vector<8x256xf32>
    %45 = arith.addf %41, %44 : vector<8x256xf32>
    %c0_24 = arith.constant 0 : index
    %c76 = arith.constant 76 : index
    %c0_25 = arith.constant 0 : index
    %46 = vector.load %arg2[%c0_24, %c76, %c0_25] : memref<1x180x256xf32, #tpu.memory_space<vmem>>, vector<1x8x256xf32>
    %47 = vector.shape_cast %46 : vector<1x8x256xf32> to vector<8x256xf32>
    %48 = arith.mulf %47, %47 : vector<8x256xf32>
    %49 = arith.addf %45, %48 : vector<8x256xf32>
    %c0_26 = arith.constant 0 : index
    %c84 = arith.constant 84 : index
    %c0_27 = arith.constant 0 : index
    %50 = vector.load %arg2[%c0_26, %c84, %c0_27] : memref<1x180x256xf32, #tpu.memory_space<vmem>>, vector<1x8x256xf32>
    %51 = vector.shape_cast %50 : vector<1x8x256xf32> to vector<8x256xf32>
    %52 = arith.mulf %51, %51 : vector<8x256xf32>
    %53 = arith.addf %49, %52 : vector<8x256xf32>
    %c0_28 = arith.constant 0 : index
    %c92 = arith.constant 92 : index
    %c0_29 = arith.constant 0 : index
    %54 = vector.load %arg2[%c0_28, %c92, %c0_29] : memref<1x180x256xf32, #tpu.memory_space<vmem>>, vector<1x8x256xf32>
    %55 = vector.shape_cast %54 : vector<1x8x256xf32> to vector<8x256xf32>
    %56 = arith.mulf %55, %55 : vector<8x256xf32>
    %57 = arith.addf %53, %56 : vector<8x256xf32>
    %c0_30 = arith.constant 0 : index
    %c100 = arith.constant 100 : index
    %c0_31 = arith.constant 0 : index
    %58 = vector.load %arg2[%c0_30, %c100, %c0_31] : memref<1x180x256xf32, #tpu.memory_space<vmem>>, vector<1x8x256xf32>
    %59 = vector.shape_cast %58 : vector<1x8x256xf32> to vector<8x256xf32>
    %60 = arith.mulf %59, %59 : vector<8x256xf32>
    %61 = arith.addf %57, %60 : vector<8x256xf32>
    %c0_32 = arith.constant 0 : index
    %c108 = arith.constant 108 : index
    %c0_33 = arith.constant 0 : index
    %62 = vector.load %arg2[%c0_32, %c108, %c0_33] : memref<1x180x256xf32, #tpu.memory_space<vmem>>, vector<1x8x256xf32>
    %63 = vector.shape_cast %62 : vector<1x8x256xf32> to vector<8x256xf32>
    %64 = arith.mulf %63, %63 : vector<8x256xf32>
    %65 = arith.addf %61, %64 : vector<8x256xf32>
    %cst_34 = arith.constant dense<0.000000e+00> : vector<256xf32>
    %66 = vector.multi_reduction <add>, %65, %cst_34 [0] : vector<8x256xf32> to vector<256xf32>
    %67 = vector.shape_cast %66 : vector<256xf32> to vector<1x256xf32>
    %c0_35 = arith.constant 0 : index
    %c116 = arith.constant 116 : index
    %c0_36 = arith.constant 0 : index
    %68 = vector.load %arg2[%c0_35, %c116, %c0_36] : memref<1x180x256xf32, #tpu.memory_space<vmem>>, vector<1x4x256xf32>
    %69 = vector.shape_cast %68 : vector<1x4x256xf32> to vector<4x256xf32>
    %70 = arith.mulf %69, %69 : vector<4x256xf32>
    %cst_37 = arith.constant dense<0.000000e+00> : vector<256xf32>
    %71 = vector.multi_reduction <add>, %70, %cst_37 [0] : vector<4x256xf32> to vector<256xf32>
    %72 = vector.shape_cast %71 : vector<256xf32> to vector<1x256xf32>
    %73 = arith.addf %67, %72 : vector<1x256xf32>
    %74 = math.sqrt %73 : vector<1x256xf32>
    %c0_38 = arith.constant 0 : index
    %c1 = arith.constant 1 : index
    %c0_39 = arith.constant 0 : index
    %75 = vector.load %arg3[%c0_38, %c1, %c0_39] : memref<1x3x256xf32, #tpu.memory_space<vmem>>, vector<1x1x256xf32>
    %76 = vector.shape_cast %75 : vector<1x1x256xf32> to vector<1x256xf32>
    %77 = vector.shape_cast %74 : vector<1x256xf32> to vector<1x1x256xf32>
    tpu.vector_store %arg3[%c0_38, %c1, %c0_39], %77 {strides = array<i32>} : memref<1x3x256xf32, #tpu.memory_space<vmem>>, vector<1x1x256xf32>,
    %78 = arith.maximumf %34, %73 : vector<1x256xf32>
    %c0_40 = arith.constant 0 : index
    %c120 = arith.constant 120 : index
    %c0_41 = arith.constant 0 : index
    %79 = vector.load %arg2[%c0_40, %c120, %c0_41] : memref<1x180x256xf32, #tpu.memory_space<vmem>>, vector<1x8x256xf32>
    %80 = vector.shape_cast %79 : vector<1x8x256xf32> to vector<8x256xf32>
    %81 = arith.mulf %80, %80 : vector<8x256xf32>
    %c0_42 = arith.constant 0 : index
    %c128 = arith.constant 128 : index
    %c0_43 = arith.constant 0 : index
    %82 = vector.load %arg2[%c0_42, %c128, %c0_43] : memref<1x180x256xf32, #tpu.memory_space<vmem>>, vector<1x8x256xf32>
    %83 = vector.shape_cast %82 : vector<1x8x256xf32> to vector<8x256xf32>
    %84 = arith.mulf %83, %83 : vector<8x256xf32>
    %85 = arith.addf %81, %84 : vector<8x256xf32>
    %c0_44 = arith.constant 0 : index
    %c136 = arith.constant 136 : index
    %c0_45 = arith.constant 0 : index
    %86 = vector.load %arg2[%c0_44, %c136, %c0_45] : memref<1x180x256xf32, #tpu.memory_space<vmem>>, vector<1x8x256xf32>
    %87 = vector.shape_cast %86 : vector<1x8x256xf32> to vector<8x256xf32>
    %88 = arith.mulf %87, %87 : vector<8x256xf32>
    %89 = arith.addf %85, %88 : vector<8x256xf32>
    %c0_46 = arith.constant 0 : index
    %c144 = arith.constant 144 : index
    %c0_47 = arith.constant 0 : index
    %90 = vector.load %arg2[%c0_46, %c144, %c0_47] : memref<1x180x256xf32, #tpu.memory_space<vmem>>, vector<1x8x256xf32>
    %91 = vector.shape_cast %90 : vector<1x8x256xf32> to vector<8x256xf32>
    %92 = arith.mulf %91, %91 : vector<8x256xf32>
    %93 = arith.addf %89, %92 : vector<8x256xf32>
    %c0_48 = arith.constant 0 : index
    %c152 = arith.constant 152 : index
    %c0_49 = arith.constant 0 : index
    %94 = vector.load %arg2[%c0_48, %c152, %c0_49] : memref<1x180x256xf32, #tpu.memory_space<vmem>>, vector<1x8x256xf32>
    %95 = vector.shape_cast %94 : vector<1x8x256xf32> to vector<8x256xf32>
    %96 = arith.mulf %95, %95 : vector<8x256xf32>
    %97 = arith.addf %93, %96 : vector<8x256xf32>
    %c0_50 = arith.constant 0 : index
    %c160 = arith.constant 160 : index
    %c0_51 = arith.constant 0 : index
    %98 = vector.load %arg2[%c0_50, %c160, %c0_51] : memref<1x180x256xf32, #tpu.memory_space<vmem>>, vector<1x8x256xf32>
    %99 = vector.shape_cast %98 : vector<1x8x256xf32> to vector<8x256xf32>
    %100 = arith.mulf %99, %99 : vector<8x256xf32>
    %101 = arith.addf %97, %100 : vector<8x256xf32>
    %c0_52 = arith.constant 0 : index
    %c168 = arith.constant 168 : index
    %c0_53 = arith.constant 0 : index
    %102 = vector.load %arg2[%c0_52, %c168, %c0_53] : memref<1x180x256xf32, #tpu.memory_space<vmem>>, vector<1x8x256xf32>
    %103 = vector.shape_cast %102 : vector<1x8x256xf32> to vector<8x256xf32>
    %104 = arith.mulf %103, %103 : vector<8x256xf32>
    %105 = arith.addf %101, %104 : vector<8x256xf32>
    %cst_54 = arith.constant dense<0.000000e+00> : vector<256xf32>
    %106 = vector.multi_reduction <add>, %105, %cst_54 [0] : vector<8x256xf32> to vector<256xf32>
    %107 = vector.shape_cast %106 : vector<256xf32> to vector<1x256xf32>
    %c0_55 = arith.constant 0 : index
    %c176 = arith.constant 176 : index
    %c0_56 = arith.constant 0 : index
    %108 = vector.load %arg2[%c0_55, %c176, %c0_56] : memref<1x180x256xf32, #tpu.memory_space<vmem>>, vector<1x4x256xf32>
    %109 = vector.shape_cast %108 : vector<1x4x256xf32> to vector<4x256xf32>
    %110 = arith.mulf %109, %109 : vector<4x256xf32>
    %cst_57 = arith.constant dense<0.000000e+00> : vector<256xf32>
    %111 = vector.multi_reduction <add>, %110, %cst_57 [0] : vector<4x256xf32> to vector<256xf32>
    %112 = vector.shape_cast %111 : vector<256xf32> to vector<1x256xf32>
    %113 = arith.addf %107, %112 : vector<1x256xf32>
    %114 = math.sqrt %113 : vector<1x256xf32>
    %c0_58 = arith.constant 0 : index
    %c2 = arith.constant 2 : index
    %c0_59 = arith.constant 0 : index
    %115 = vector.load %arg3[%c0_58, %c2, %c0_59] : memref<1x3x256xf32, #tpu.memory_space<vmem>>, vector<1x1x256xf32>
    %116 = vector.shape_cast %115 : vector<1x1x256xf32> to vector<1x256xf32>
    %117 = vector.shape_cast %114 : vector<1x256xf32> to vector<1x1x256xf32>
    tpu.vector_store %arg3[%c0_58, %c2, %c0_59], %117 {strides = array<i32>} : memref<1x3x256xf32, #tpu.memory_space<vmem>>, vector<1x1x256xf32>,
    %118 = arith.maximumf %78, %113 : vector<1x256xf32>
    %119 = math.sqrt %118 : vector<1x256xf32>
    %c0_60 = arith.constant 0 : index
    %c0_61 = arith.constant 0 : index
    %c0_62 = arith.constant 0 : index
    %120 = vector.load %arg4[%c0_60, %c0_61, %c0_62] : memref<1x1x256xf32, #tpu.memory_space<vmem>>, vector<1x1x256xf32>
    %121 = vector.shape_cast %120 : vector<1x1x256xf32> to vector<1x256xf32>
    %122 = vector.shape_cast %119 : vector<1x256xf32> to vector<1x1x256xf32>
    tpu.vector_store %arg4[%c0_60, %c0_61, %c0_62], %122 {strides = array<i32>} : memref<1x1x256xf32, #tpu.memory_space<vmem>>, vector<1x1x256xf32>,
    return
  }
  func.func @transform_0(%arg0: i32, %arg1: i32) -> (i32, i32, i32) {
    %c0_i32 = arith.constant 0 : i32
    %c0_i32_0 = arith.constant 0 : i32
    return %arg0, %c0_i32, %arg1 : i32, i32, i32
  }
  func.func @transform_1(%arg0: i32, %arg1: i32) -> (i32, i32, i32) {
    %c0_i32 = arith.constant 0 : i32
    %c0_i32_0 = arith.constant 0 : i32
    return %arg0, %c0_i32, %arg1 : i32, i32, i32
  }
  func.func @transform_2(%arg0: i32, %arg1: i32) -> (i32, i32, i32) {
    %c0_i32 = arith.constant 0 : i32
    %c0_i32_0 = arith.constant 0 : i32
    return %arg0, %c0_i32, %arg1 : i32, i32, i32
  }
}

</mosaic_0001>

<llo_original>
// kernel: tpu_custom_call.1
$region0: #{tpu_custom_call.1}
  #allocation0 [shape = 'u32[]', space=smem, size = 0x4, offset = 0x4, fixed_abs, tag = 'smem constant byte address 0x4 - core index']
  #allocation1 [shape = 'u32[144,128]{1,0:T(1,128)}', space=vmem, size = 0x12000, scoped, tag = 'internal scratch']
  %s0 = inlined_call_operand.vmem [shape: f32[2,180,256], index: 0, kind: input, shape index: {}]
  %s1 = inlined_call_operand.vmem [shape: f32[2,3,256], index: 1, kind: output, shape index: {0}]
  %s2 = inlined_call_operand.hbm [shape: f32[2,1,256], index: 2, kind: output, shape index: {1}]
  %3 = xla_tuple %s1, %s2
  %s4 = sld [smem:[#allocation0]]
  $region45: #{tpu_custom_call.1} parent=0
    _
  %s6 = ssub.s32 1, %s4
  %s7 = scalar_select 0, %s6, %s4
  $region1: #{tpu_custom_call.1} parent=0
    #allocation2 [shape = 'u8[2048]{0}', space=vmem, size = 0x800, scoped, tag = 'output window, operand 1']
    #allocation3 [shape = 's32[2]{0}', space=sflag, size = 0x8, scoped, tag = 'scoped memory for tpu_custom_call.1']
    %8 = vsyncpa [#allocation3], 0
    %s9 = scalar_lea.sflag [#allocation3], 1
    %10 = vsyncpa %s9, 0
    loop: start=0, step=1, limit=4
    $region2: #{tpu_custom_call.1} parent=1 // loop_pre_header
      _
    $region3: #{tpu_custom_call.1} parent=1 // loop_header
      %s12 = sphi 0, %s16
      %p13 = scmp.ge.s32.totalorder %s12, 4
      %s19 = sphi 0, %s31
      %s20 = sphi 0, %s27
      %s21 = sphi 0, %s19
      %s22 = sphi 0, %s20
      %s23 = sphi 0, %s21
      %s24 = sphi 0, %s22
      %s36 = sphi 0, %s38
      %s39 = sphi 0, %s36
      %s40 = sphi 0, %s39
      %s56 = sphi 0, %s40
      %s64 = sphi 0, %s66
      %s67 = sphi 0, %s64
      %s68 = sphi 0, %s67
      %s84 = sphi 0, %s68
      %s92 = sphi 0, %s94
      %s95 = sphi 0, %s92
      %s96 = sphi 0, %s95
      %s112 = sphi 0, %s96
    $region4: #{tpu_custom_call.1} parent=1 // loop_header_branch
      %15 = sbr.rel (%p13) target = $region8
    $region5: #{tpu_custom_call.1} parent=1 // loop_body
      %s17 = ssub.s32 %s12, 1
      %s18 = ssub.s32 %s12, 2
      %s25 = sadd.s32 1, %s20
      %p26 = scmp.ge.s32.totalorder %s25, 1
      %s27 = scalar_select %p26, 0, %s25
      %s28 = sadd.s32 1, %s19
      %s29 = scalar_select %p26, %s28, %s19
      %p30 = scmp.ge.s32.totalorder %s29, 2
      %s31 = scalar_select %p30, 0, %s29
      %s32 = ssub.s32 %s19, %s31
      %s33 = ssub.s32 %s20, %s27
      %s34 = sor.u32 %s32, %s33
      %p35 = scmp.eq.s32.totalorder %s34, 0
      %s37 = sadd.s32 %s36, 1
      %s38 = scalar_select %p35, %s36, %s37
      %p41 = pneg %p35
      %p42 = scmp.eq.s32.totalorder %s12, 1
      %p43 = por %p41, %p42
      %p44 = scmp.ne.s32.totalorder %s36, %s39
      %p45 = scmp.eq.s32.totalorder %s12, 0
      %p46 = por %p44, %p45
      %p47 = scmp.ne.s32.totalorder %s36, %s39
      %p48 = scmp.eq.s32.totalorder %s17, 1
      %p49 = por %p47, %p48
      %p50 = scmp.ne.s32.totalorder %s39, %s40
      %p51 = scmp.eq.s32.totalorder %s17, 0
      %p52 = por %p50, %p51
      %p53 = scmp.ne.s32.totalorder %s39, %s40
      %p54 = scmp.eq.s32.totalorder %s18, 1
      %p55 = por %p53, %p54
      %p57 = scmp.ne.s32.totalorder %s40, %s56
      %p58 = scmp.eq.s32.totalorder %s18, 0
      %p59 = por %p57, %p58
      %s60 = ssub.s32 %s19, %s31
      %s61 = ssub.s32 %s20, %s27
      %s62 = sor.u32 %s60, %s61
      %p63 = scmp.eq.s32.totalorder %s62, 0
      %s65 = sadd.s32 %s64, 1
      %s66 = scalar_select %p63, %s64, %s65
      %p69 = pneg %p63
      %p70 = scmp.eq.s32.totalorder %s12, 1
      %p71 = por %p69, %p70
      %p72 = scmp.ne.s32.totalorder %s64, %s67
      %p73 = scmp.eq.s32.totalorder %s12, 0
      %p74 = por %p72, %p73
      %p75 = scmp.ne.s32.totalorder %s64, %s67
      %p76 = scmp.eq.s32.totalorder %s17, 1
      %p77 = por %p75, %p76
      %p78 = scmp.ne.s32.totalorder %s67, %s68
      %p79 = scmp.eq.s32.totalorder %s17, 0
      %p80 = por %p78, %p79
      %p81 = scmp.ne.s32.totalorder %s67, %s68
      %p82 = scmp.eq.s32.totalorder %s18, 1
      %p83 = por %p81, %p82
      %p85 = scmp.ne.s32.totalorder %s68, %s84
      %p86 = scmp.eq.s32.totalorder %s18, 0
      %p87 = por %p85, %p86
      %s88 = ssub.s32 %s19, %s31
      %s89 = ssub.s32 %s20, %s27
      %s90 = sor.u32 %s88, %s89
      %p91 = scmp.eq.s32.totalorder %s90, 0
      %s93 = sadd.s32 %s92, 1
      %s94 = scalar_select %p91, %s92, %s93
      %p97 = pneg %p91
      %p98 = scmp.eq.s32.totalorder %s12, 1
      %p99 = por %p97, %p98
      %p100 = scmp.ne.s32.totalorder %s92, %s95
      %p101 = scmp.eq.s32.totalorder %s12, 0
      %p102 = por %p100, %p101
      %p103 = scmp.ne.s32.totalorder %s92, %s95
      %p104 = scmp.eq.s32.totalorder %s17, 1
      %p105 = por %p103, %p104
      %p106 = scmp.ne.s32.totalorder %s95, %s96
      %p107 = scmp.eq.s32.totalorder %s17, 0
      %p108 = por %p106, %p107
      %p109 = scmp.ne.s32.totalorder %s95, %s96
      %p110 = scmp.eq.s32.totalorder %s18, 1
      %p111 = por %p109, %p110
      %p113 = scmp.ne.s32.totalorder %s96, %s112
      %p114 = scmp.eq.s32.totalorder %s18, 0
      %p115 = por %p113, %p114
      %p116 = scmp.le.s32.totalorder 1, %s12
      %p117 = scmp.lt.s32.totalorder %s12, 3
      %p118 = pnand %p116, %p117
      %p119 = pneg %p118
      // Predicated region
      $region9: #{tpu_custom_call.1} parent=5 // pred_check
        _
      $region10: #{tpu_custom_call.1} parent=5 // pred_check_branch
        %121 = sbr.rel (%p118) target = $region12
      $region11: #{tpu_custom_call.1} parent=5 // pred_region
        %s122 = ssub.s32 %s12, 1
      $region12: #{tpu_custom_call.1} parent=5 // pred_fallthru
        _
      %p123 = scmp.lt.s32.totalorder %s12, 2
      // Predicated region
      $region13: #{tpu_custom_call.1} parent=5 // pred_check
        %p124 = pneg %p123
      $region14: #{tpu_custom_call.1} parent=5 // pred_check_branch
        %126 = sbr.rel (%p124) target = $region16
      $region15: #{tpu_custom_call.1} parent=5 // pred_region
        // Predicated region
        $region17: #{tpu_custom_call.1} parent=15 // pred_check
          %p127 = pneg %p46
        $region18: #{tpu_custom_call.1} parent=15 // pred_check_branch
          %129 = sbr.rel (%p127) target = $region20
        $region19: #{tpu_custom_call.1} parent=15 // pred_region
          %s130 = smul.u32 2, %s20
          %p131 = scmp.lt.s32.totalorder %s19, 1
          %s132 = scalar_select %p131, %s19, 1
          %p133 = scmp.lt.s32.totalorder %s130, 1
          %s134 = scalar_select %p133, %s130, 1
          %s135 = smul.addr %s132, 46
          %s136 = sadd.s32 %s134, %s135
          %s137 = smul.addr %s136, 8
          %s138 = scalar_lea.vmem %s0, %s137
          %s139 = smul.u32 2, %s20
        $region20: #{tpu_custom_call.1} parent=15 // pred_fallthru
          _
      $region16: #{tpu_custom_call.1} parent=5 // pred_fallthru
        _
      %p140 = scmp.le.s32.totalorder 1, %s12
      %p141 = scmp.lt.s32.totalorder %s12, 3
      %p142 = pnand %p140, %p141
      %p143 = pneg %p142
      // Predicated region
      $region21: #{tpu_custom_call.1} parent=5 // pred_check
        _
      $region22: #{tpu_custom_call.1} parent=5 // pred_check_branch
        %145 = sbr.rel (%p142) target = $region24
      $region23: #{tpu_custom_call.1} parent=5 // pred_region
        %s146 = ssub.s32 %s12, 1
        %s147 = smul.u32 2, %s22
        %p148 = scmp.lt.s32.totalorder %s21, 1
        %s149 = scalar_select %p148, %s21, 1
        %p150 = scmp.lt.s32.totalorder %s147, 1
        %s151 = scalar_select %p150, %s147, 1
        %s152 = smul.addr %s149, 46
        %s153 = sadd.s32 %s151, %s152
        %s154 = smul.addr %s153, 8
        %s155 = scalar_lea.vmem %s0, %s154
        %p156 = pneg %p52
        %p157 = pneg %p49
        %p158 = pneg %p80
        %p159 = pneg %p77
        %s160 = smul.u32 2, %s22
        %p161 = scmp.lt.s32.totalorder %s21, 1
        %s162 = scalar_select %p161, %s21, 1
        %p163 = scmp.lt.s32.totalorder %s160, 1
        %s164 = scalar_select %p163, %s160, 1
        %s165 = smul.addr %s162, 2
        %s166 = sadd.s32 %s164, %s165
        %s167 = smul.addr %s166, 4
        %s168 = scalar_lea.vmem %s1, %s167
        %p169 = pneg %p108
        %p170 = pneg %p105
        %s171 = sand.u32 %s95, 1
        %s172 = scalar_lea.sflag [#allocation3], %s171
        %s173 = sand.u32 %s95, 1
        %s174 = smul.addr %s173, 2
        %s175 = scalar_lea.vmem [#allocation2], %s174
        %s176 = smul.u32 2, %s22
        %p177 = scmp.lt.s32.totalorder %s21, 1
        %s178 = scalar_select %p177, %s21, 1
        %p179 = scmp.lt.s32.totalorder %s176, 1
        %s180 = scalar_select %p179, %s176, 1
        %s181 = smul.addr %s178, 46
        %s182 = sadd.s32 %s180, %s181
        %s183 = smul.addr %s182, 8
        %s184 = scalar_lea.vmem %s0, %s183
        %s185 = smul.u32 2, %s22
        %s186 = smul.u32 2, %s22
        %p187 = scmp.lt.s32.totalorder %s21, 1
        %s188 = scalar_select %p187, %s21, 1
        %p189 = scmp.lt.s32.totalorder %s186, 1
        %s190 = scalar_select %p189, %s186, 1
        %s191 = smul.addr %s188, 2
        %s192 = sadd.s32 %s190, %s191
        %s193 = smul.addr %s192, 4
        %s194 = scalar_lea.vmem %s1, %s193
        %s195 = smul.u32 2, %s22
        %s196 = smul.u32 2, %s22
        %v197 = vld [vmem:[%s184] sm:$0xff]
        %v198 = vld [vmem:[%s184 + $0x8] sm:$0xff]
        %v199 = vmul.f32 %v197, %v197
        %v200 = vmul.f32 %v198, %v198
        %v201 = vld [vmem:[%s184 + $0x10] sm:$0xff]
        %v202 = vld [vmem:[%s184 + $0x18] sm:$0xff]
        %v203 = vmul.f32 %v201, %v201
        %v204 = vmul.f32 %v202, %v202
        %v205 = vadd.f32 %v199, %v203
        %v206 = vadd.f32 %v200, %v204
        %v207 = vld [vmem:[%s184 + $0x20] sm:$0xff]
        %v208 = vld [vmem:[%s184 + $0x28] sm:$0xff]
        %v209 = vmul.f32 %v207, %v207
        %v210 = vmul.f32 %v208, %v208
        %v211 = vadd.f32 %v205, %v209
        %v212 = vadd.f32 %v206, %v210
        %v213 = vld [vmem:[%s184 + $0x30] sm:$0xff]
        %v214 = vld [vmem:[%s184 + $0x38] sm:$0xff]
        %v215 = vmul.f32 %v213, %v213
        %v216 = vmul.f32 %v214, %v214
        %v217 = vadd.f32 %v211, %v215
        %v218 = vadd.f32 %v212, %v216
        %v219 = vld [vmem:[%s184 + $0x40] sm:$0xff]
        %v220 = vld [vmem:[%s184 + $0x48] sm:$0xff]
        %v221 = vmul.f32 %v219, %v219
        %v222 = vmul.f32 %v220, %v220
        %v223 = vadd.f32 %v217, %v221
        %v224 = vadd.f32 %v218, %v222
        %v225 = vld [vmem:[%s184 + $0x50] sm:$0xff]
        %v226 = vld [vmem:[%s184 + $0x58] sm:$0xff]
        %v227 = vmul.f32 %v225, %v225
        %v228 = vmul.f32 %v226, %v226
        %v229 = vadd.f32 %v223, %v227
        %v230 = vadd.f32 %v224, %v228
        %v231 = vld [vmem:[%s184 + $0x60] sm:$0xff]
        %v232 = vld [vmem:[%s184 + $0x68] sm:$0xff]
        %v233 = vmul.f32 %v231, %v231
        %v234 = vmul.f32 %v232, %v232
        %v235 = vadd.f32 %v229, %v233
        %v236 = vadd.f32 %v230, %v234
        %v237 = vrot.slane %v235, 4
        %v238 = vadd.f32 %v235, %v237
        %v239 = vrot.slane %v238, 2
        %v240 = vadd.f32 %v238, %v239
        %v241 = vrot.slane %v240, 1
        %v242 = vadd.f32 %v240, %v241
        %v243 = vrot.slane %v236, 4
        %v244 = vadd.f32 %v236, %v243
        %v245 = vrot.slane %v244, 2
        %v246 = vadd.f32 %v244, %v245
        %v247 = vrot.slane %v246, 1
        %v248 = vadd.f32 %v246, %v247
        %v249 = vld [vmem:[%s184 + $0x70] sm:$0xf]
        %v250 = vld [vmem:[%s184 + $0x78] sm:$0xf]
        %v251 = vmul.f32 %v249, %v249
        %v252 = vmul.f32 %v250, %v250
        %vm253 = vcmask 1043456
        %v254 = vsel %vm253, %v251, 0.0
        %v255 = vrot.slane %v254, 4
        %v256 = vadd.f32 %v254, %v255
        %v257 = vrot.slane %v256, 2
        %v258 = vadd.f32 %v256, %v257
        %v259 = vrot.slane %v258, 1
        %v260 = vadd.f32 %v258, %v259
        %v261 = vsel %vm253, %v252, 0.0
        %v262 = vrot.slane %v261, 4
        %v263 = vadd.f32 %v261, %v262
        %v264 = vrot.slane %v263, 2
        %v265 = vadd.f32 %v263, %v264
        %v266 = vrot.slane %v265, 1
        %v267 = vadd.f32 %v265, %v266
        %v268 = vadd.f32 %v242, %v260
        %v269 = vadd.f32 %v248, %v267
        %v270 = vrsqrt.pop %v268
        %v271 = vmul.f32 %v268, %v270
        %vm272 = vcmp.eq.f32.partialorder %v268, inf
        %v273 = vsel %vm272, %v268, %v271
        %vm274 = vcmp.eq.f32.partialorder %v268, 0.0
        %v275 = vand.u32 %v268, 2147483648
        %v276 = vsel %vm274, %v275, %v273
        %v277 = vrsqrt.pop %v269
        %v278 = vmul.f32 %v269, %v277
        %vm279 = vcmp.eq.f32.partialorder %v269, inf
        %v280 = vsel %vm279, %v269, %v278
        %vm281 = vcmp.eq.f32.partialorder %v269, 0.0
        %v282 = vand.u32 %v269, 2147483648
        %v283 = vsel %vm281, %v282, %v280
        %v286 = vcombine.low %v276, %v283
        %v288 = vunpack.c.l.s4 1966171168
        %v289 = vunpack.c.0.s8 %v288
        %v290 = vlaneseq
        %v291 = vshrl.u32 %v290, 7
        %v292 = vsub.s32 %v289, %v291
        %v293 = vrot.slane %v286, %v292
        %v295 = vunpack.c.l.s4 1966171168
        %v296 = vunpack.c.0.s8 %v295
        %v297 = vlaneseq
        %v298 = vshrl.u32 %v297, 7
        %v299 = vsub.s32 %v296, %v298
        %v300 = vrot.slane %v293, %v299
        %v302 = vlaneseq
        %vm303 = vcmp.ge.s32.totalorder %v302, 0
        %vm304 = vcmp.lt.s32.totalorder %v302, 256
        %vm305 = vmand %vm303, %vm304
        %306 = vst.msk [vmem:[%s194] ss:$4 sm:$0x3] %vm305, %v300
        %v307 = vld [vmem:[%s184 + $0x70] sm:$0xf0]
        %v308 = vld [vmem:[%s184 + $0x78] sm:$0xf0]
        %v309 = vld [vmem:[%s184 + $0x80] sm:$0xf]
        %v310 = vld [vmem:[%s184 + $0x88] sm:$0xf]
        %v311 = vmul.f32 %v307, %v307
        %v312 = vmul.f32 %v308, %v308
        %v313 = vmul.f32 %v309, %v309
        %v314 = vmul.f32 %v310, %v310
        %v315 = vld [vmem:[%s184 + $0x80] sm:$0xf0]
        %v316 = vld [vmem:[%s184 + $0x88] sm:$0xf0]
        %v317 = vld [vmem:[%s184 + $0x90] sm:$0xf]
        %v318 = vld [vmem:[%s184 + $0x98] sm:$0xf]
        %v319 = vmul.f32 %v315, %v315
        %v320 = vmul.f32 %v316, %v316
        %v321 = vmul.f32 %v317, %v317
        %v322 = vmul.f32 %v318, %v318
        %v323 = vadd.f32 %v311, %v319
        %v324 = vadd.f32 %v312, %v320
        %v325 = vadd.f32 %v313, %v321
        %v326 = vadd.f32 %v314, %v322
        %v327 = vld [vmem:[%s184 + $0x90] sm:$0xf0]
        %v328 = vld [vmem:[%s184 + $0x98] sm:$0xf0]
        %v329 = vld [vmem:[%s184 + $0xa0] sm:$0xf]
        %v330 = vld [vmem:[%s184 + $0xa8] sm:$0xf]
        %v331 = vmul.f32 %v327, %v327
        %v332 = vmul.f32 %v328, %v328
        %v333 = vmul.f32 %v329, %v329
        %v334 = vmul.f32 %v330, %v330
        %v335 = vadd.f32 %v323, %v331
        %v336 = vadd.f32 %v324, %v332
        %v337 = vadd.f32 %v325, %v333
        %v338 = vadd.f32 %v326, %v334
        %v339 = vld [vmem:[%s184 + $0xa0] sm:$0xf0]
        %v340 = vld [vmem:[%s184 + $0xa8] sm:$0xf0]
        %v341 = vld [vmem:[%s184 + $0xb0] sm:$0xf]
        %v342 = vld [vmem:[%s184 + $0xb8] sm:$0xf]
        %v343 = vmul.f32 %v339, %v339
        %v344 = vmul.f32 %v340, %v340
        %v345 = vmul.f32 %v341, %v341
        %v346 = vmul.f32 %v342, %v342
        %v347 = vadd.f32 %v335, %v343
        %v348 = vadd.f32 %v336, %v344
        %v349 = vadd.f32 %v337, %v345
        %v350 = vadd.f32 %v338, %v346
        %v351 = vld [vmem:[%s184 + $0xb0] sm:$0xf0]
        %v352 = vld [vmem:[%s184 + $0xb8] sm:$0xf0]
        %v353 = vld [vmem:[%s184 + $0xc0] sm:$0xf]
        %v354 = vld [vmem:[%s184 + $0xc8] sm:$0xf]
        %v355 = vmul.f32 %v351, %v351
        %v356 = vmul.f32 %v352, %v352
        %v357 = vmul.f32 %v353, %v353
        %v358 = vmul.f32 %v354, %v354
        %v359 = vadd.f32 %v347, %v355
        %v360 = vadd.f32 %v348, %v356
        %v361 = vadd.f32 %v349, %v357
        %v362 = vadd.f32 %v350, %v358
        %v363 = vld [vmem:[%s184 + $0xc0] sm:$0xf0]
        %v364 = vld [vmem:[%s184 + $0xc8] sm:$0xf0]
        %v365 = vld [vmem:[%s184 + $0xd0] sm:$0xf]
        %v366 = vld [vmem:[%s184 + $0xd8] sm:$0xf]
        %v367 = vmul.f32 %v363, %v363
        %v368 = vmul.f32 %v364, %v364
        %v369 = vmul.f32 %v365, %v365
        %v370 = vmul.f32 %v366, %v366
        %v371 = vadd.f32 %v359, %v367
        %v372 = vadd.f32 %v360, %v368
        %v373 = vadd.f32 %v361, %v369
        %v374 = vadd.f32 %v362, %v370
        %v375 = vld [vmem:[%s184 + $0xd0] sm:$0xf0]
        %v376 = vld [vmem:[%s184 + $0xd8] sm:$0xf0]
        %v377 = vld [vmem:[%s184 + $0xe0] sm:$0xf]
        %v378 = vld [vmem:[%s184 + $0xe8] sm:$0xf]
        %v379 = vmul.f32 %v375, %v375
        %v380 = vmul.f32 %v376, %v376
        %v381 = vmul.f32 %v377, %v377
        %v382 = vmul.f32 %v378, %v378
        %v383 = vadd.f32 %v371, %v379
        %v384 = vadd.f32 %v372, %v380
        %v385 = vadd.f32 %v373, %v381
        %v386 = vadd.f32 %v374, %v382
        %v391 = vrot.slane %v383, 4
        %v392 = vrot.slane %v385, 4
        %v393 = vsel %vm253, %v391, %v392
        %v394 = vrot.slane %v384, 4
        %v395 = vrot.slane %v386, 4
        %v396 = vsel %vm253, %v394, %v395
        %v399 = vrot.slane %v393, 4
        %v400 = vadd.f32 %v393, %v399
        %v401 = vrot.slane %v400, 2
        %v402 = vadd.f32 %v400, %v401
        %v403 = vrot.slane %v402, 1
        %v404 = vadd.f32 %v402, %v403
        %v405 = vrot.slane %v396, 4
        %v406 = vadd.f32 %v396, %v405
        %v407 = vrot.slane %v406, 2
        %v408 = vadd.f32 %v406, %v407
        %v409 = vrot.slane %v408, 1
        %v410 = vadd.f32 %v408, %v409
        %v411 = vld [vmem:[%s184 + $0xe0] sm:$0xf0]
        %v412 = vld [vmem:[%s184 + $0xe8] sm:$0xf0]
        %v413 = vmul.f32 %v411, %v411
        %v414 = vmul.f32 %v412, %v412
        %v417 = vrot.slane %v413, 4
        %v418 = vrot.slane %v414, 4
        %v421 = vsel %vm253, %v417, 0.0
        %v422 = vrot.slane %v421, 4
        %v423 = vadd.f32 %v421, %v422
        %v424 = vrot.slane %v423, 2
        %v425 = vadd.f32 %v423, %v424
        %v426 = vrot.slane %v425, 1
        %v427 = vadd.f32 %v425, %v426
        %v428 = vsel %vm253, %v418, 0.0
        %v429 = vrot.slane %v428, 4
        %v430 = vadd.f32 %v428, %v429
        %v431 = vrot.slane %v430, 2
        %v432 = vadd.f32 %v430, %v431
        %v433 = vrot.slane %v432, 1
        %v434 = vadd.f32 %v432, %v433
        %v435 = vadd.f32 %v404, %v427
        %v436 = vadd.f32 %v410, %v434
        %v437 = vrsqrt.pop %v435
        %v438 = vmul.f32 %v435, %v437
        %vm439 = vcmp.eq.f32.partialorder %v435, inf
        %v440 = vsel %vm439, %v435, %v438
        %vm441 = vcmp.eq.f32.partialorder %v435, 0.0
        %v442 = vand.u32 %v435, 2147483648
        %v443 = vsel %vm441, %v442, %v440
        %v444 = vrsqrt.pop %v436
        %v445 = vmul.f32 %v436, %v444
        %vm446 = vcmp.eq.f32.partialorder %v436, inf
        %v447 = vsel %vm446, %v436, %v445
        %vm448 = vcmp.eq.f32.partialorder %v436, 0.0
        %v449 = vand.u32 %v436, 2147483648
        %v450 = vsel %vm448, %v449, %v447
        %v453 = vcombine.low %v443, %v450
        %v455 = vunpack.c.l.s4 1966171168
        %v456 = vunpack.c.0.s8 %v455
        %v457 = vlaneseq
        %v458 = vshrl.u32 %v457, 7
        %v459 = vsub.s32 %v456, %v458
        %v460 = vrot.slane %v453, %v459
        %v462 = vunpack.c.l.s4 1966171168
        %v463 = vunpack.c.0.s8 %v462
        %v464 = vlaneseq
        %v465 = vshrl.u32 %v464, 7
        %v466 = vsub.s32 %v463, %v465
        %v467 = vrot.slane %v460, %v466
        %s469 = scalar_lea.vmem %s194, 1
        %470 = vst.msk [vmem:[%s469] ss:$4 sm:$0x3] %vm305, %v467
        %v471 = vmax.f32 %v268, %v435
        %v472 = vmax.f32 %v269, %v436
        %v473 = vld [vmem:[%s184 + $0xf0] sm:$0xff]
        %v474 = vld [vmem:[%s184 + $0xf8] sm:$0xff]
        %v475 = vmul.f32 %v473, %v473
        %v476 = vmul.f32 %v474, %v474
        %v477 = vld [vmem:[%s184 + $0x100] sm:$0xff]
        %v478 = vld [vmem:[%s184 + $0x108] sm:$0xff]
        %v479 = vmul.f32 %v477, %v477
        %v480 = vmul.f32 %v478, %v478
        %v481 = vadd.f32 %v475, %v479
        %v482 = vadd.f32 %v476, %v480
        %v483 = vld [vmem:[%s184 + $0x110] sm:$0xff]
        %v484 = vld [vmem:[%s184 + $0x118] sm:$0xff]
        %v485 = vmul.f32 %v483, %v483
        %v486 = vmul.f32 %v484, %v484
        %v487 = vadd.f32 %v481, %v485
        %v488 = vadd.f32 %v482, %v486
        %v489 = vld [vmem:[%s184 + $0x120] sm:$0xff]
        %v490 = vld [vmem:[%s184 + $0x128] sm:$0xff]
        %v491 = vmul.f32 %v489, %v489
        %v492 = vmul.f32 %v490, %v490
        %v493 = vadd.f32 %v487, %v491
        %v494 = vadd.f32 %v488, %v492
        %v495 = vld [vmem:[%s184 + $0x130] sm:$0xff]
        %v496 = vld [vmem:[%s184 + $0x138] sm:$0xff]
        %v497 = vmul.f32 %v495, %v495
        %v498 = vmul.f32 %v496, %v496
        %v499 = vadd.f32 %v493, %v497
        %v500 = vadd.f32 %v494, %v498
        %v501 = vld [vmem:[%s184 + $0x140] sm:$0xff]
        %v502 = vld [vmem:[%s184 + $0x148] sm:$0xff]
        %v503 = vmul.f32 %v501, %v501
        %v504 = vmul.f32 %v502, %v502
        %v505 = vadd.f32 %v499, %v503
        %v506 = vadd.f32 %v500, %v504
        %v507 = vld [vmem:[%s184 + $0x150] sm:$0xff]
        %v508 = vld [vmem:[%s184 + $0x158] sm:$0xff]
        %v509 = vmul.f32 %v507, %v507
        %v510 = vmul.f32 %v508, %v508
        %v511 = vadd.f32 %v505, %v509
        %v512 = vadd.f32 %v506, %v510
        %v513 = vrot.slane %v511, 4
        %v514 = vadd.f32 %v511, %v513
        %v515 = vrot.slane %v514, 2
        %v516 = vadd.f32 %v514, %v515
        %v517 = vrot.slane %v516, 1
        %v518 = vadd.f32 %v516, %v517
        %v519 = vrot.slane %v512, 4
        %v520 = vadd.f32 %v512, %v519
        %v521 = vrot.slane %v520, 2
        %v522 = vadd.f32 %v520, %v521
        %v523 = vrot.slane %v522, 1
        %v524 = vadd.f32 %v522, %v523
        %v525 = vld [vmem:[%s184 + $0x160] sm:$0xf]
        %v526 = vld [vmem:[%s184 + $0x168] sm:$0xf]
        %v527 = vmul.f32 %v525, %v525
        %v528 = vmul.f32 %v526, %v526
        %v529 = vsel %vm253, %v527, 0.0
        %v530 = vrot.slane %v529, 4
        %v531 = vadd.f32 %v529, %v530
        %v532 = vrot.slane %v531, 2
        %v533 = vadd.f32 %v531, %v532
        %v534 = vrot.slane %v533, 1
        %v535 = vadd.f32 %v533, %v534
        %v536 = vsel %vm253, %v528, 0.0
        %v537 = vrot.slane %v536, 4
        %v538 = vadd.f32 %v536, %v537
        %v539 = vrot.slane %v538, 2
        %v540 = vadd.f32 %v538, %v539
        %v541 = vrot.slane %v540, 1
        %v542 = vadd.f32 %v540, %v541
        %v543 = vadd.f32 %v518, %v535
        %v544 = vadd.f32 %v524, %v542
        %v545 = vrsqrt.pop %v543
        %v546 = vmul.f32 %v543, %v545
        %vm547 = vcmp.eq.f32.partialorder %v543, inf
        %v548 = vsel %vm547, %v543, %v546
        %vm549 = vcmp.eq.f32.partialorder %v543, 0.0
        %v550 = vand.u32 %v543, 2147483648
        %v551 = vsel %vm549, %v550, %v548
        %v552 = vrsqrt.pop %v544
        %v553 = vmul.f32 %v544, %v552
        %vm554 = vcmp.eq.f32.partialorder %v544, inf
        %v555 = vsel %vm554, %v544, %v553
        %vm556 = vcmp.eq.f32.partialorder %v544, 0.0
        %v557 = vand.u32 %v544, 2147483648
        %v558 = vsel %vm556, %v557, %v555
        %v561 = vcombine.low %v551, %v558
        %v563 = vunpack.c.l.s4 1966171168
        %v564 = vunpack.c.0.s8 %v563
        %v565 = vlaneseq
        %v566 = vshrl.u32 %v565, 7
        %v567 = vsub.s32 %v564, %v566
        %v568 = vrot.slane %v561, %v567
        %v570 = vunpack.c.l.s4 1966171168
        %v571 = vunpack.c.0.s8 %v570
        %v572 = vlaneseq
        %v573 = vshrl.u32 %v572, 7
        %v574 = vsub.s32 %v571, %v573
        %v575 = vrot.slane %v568, %v574
        %s577 = scalar_lea.vmem %s194, 2
        %578 = vst.msk [vmem:[%s577] ss:$4 sm:$0x3] %vm305, %v575
        %v579 = vmax.f32 %v471, %v543
        %v580 = vmax.f32 %v472, %v544
        %v581 = vrsqrt.pop %v579
        %v582 = vmul.f32 %v579, %v581
        %vm583 = vcmp.eq.f32.partialorder %v579, inf
        %v584 = vsel %vm583, %v579, %v582
        %vm585 = vcmp.eq.f32.partialorder %v579, 0.0
        %v586 = vand.u32 %v579, 2147483648
        %v587 = vsel %vm585, %v586, %v584
        %v588 = vrsqrt.pop %v580
        %v589 = vmul.f32 %v580, %v588
        %vm590 = vcmp.eq.f32.partialorder %v580, inf
        %v591 = vsel %vm590, %v580, %v589
        %vm592 = vcmp.eq.f32.partialorder %v580, 0.0
        %v593 = vand.u32 %v580, 2147483648
        %v594 = vsel %vm592, %v593, %v591
        %v597 = vcombine.low %v587, %v594
        %v599 = vunpack.c.l.s4 1966171168
        %v600 = vunpack.c.0.s8 %v599
        %v601 = vlaneseq
        %v602 = vshrl.u32 %v601, 7
        %v603 = vsub.s32 %v600, %v602
        %v604 = vrot.slane %v597, %v603
        %v606 = vunpack.c.l.s4 1966171168
        %v607 = vunpack.c.0.s8 %v606
        %v608 = vlaneseq
        %v609 = vshrl.u32 %v608, 7
        %v610 = vsub.s32 %v607, %v609
        %v611 = vrot.slane %v604, %v610
        %613 = vst.msk [vmem:[%s175] sm:$0x3] %vm305, %v611
        %s614 = smul.u32 2, %s22
        %p615 = scmp.lt.s32.totalorder %s21, 1
        %s616 = scalar_select %p615, %s21, 1
        %p617 = scmp.lt.s32.totalorder %s614, 1
        %s618 = scalar_select %p617, %s614, 1
        %s619 = smul.addr %s616, 2
        %s620 = sadd.s32 %s618, %s619
        %s621 = smul.addr %s620, 4
        %s622 = scalar_lea.vmem %s1, %s621
        %s623 = sand.u32 %s95, 1
        %s624 = scalar_lea.sflag [#allocation3], %s623
        %s625 = sand.u32 %s95, 1
        %s626 = smul.addr %s625, 2
        %s627 = scalar_lea.vmem [#allocation2], %s626
        // Predicated region
        $region25: #{tpu_custom_call.1} parent=23 // pred_check
          %p628 = pneg %p77
        $region26: #{tpu_custom_call.1} parent=23 // pred_check_branch
          %630 = sbr.rel (%p628) target = $region28
        $region27: #{tpu_custom_call.1} parent=23 // pred_region
          %s631 = smul.u32 2, %s22
        $region28: #{tpu_custom_call.1} parent=23 // pred_fallthru
          _
        // Predicated region
        $region29: #{tpu_custom_call.1} parent=23 // pred_check
          %p632 = pneg %p105
        $region30: #{tpu_custom_call.1} parent=23 // pred_check_branch
          %634 = sbr.rel (%p632) target = $region32
        $region31: #{tpu_custom_call.1} parent=23 // pred_region
          %s635 = smul.u32 2, %s22
          %s637 = ssub.s32 32, 32
          %638 = vsyncadd %s624, %s637
          %s639 = smul.addr %s21, 2
          %s640 = sadd.s32 %s635, %s639
          %s641 = smul.addr %s640, 16
          %s642 = scalar_lea.hbm %s2, %s641
          %s644 = sshll.u32 %s627, 4
          %s645 = int_to_ptr.vmem [resolvable:$true] %s644
          %647 = dma.vmem_to_hbm [thread:$0]  %s645, 32, %s642, %s624
        $region32: #{tpu_custom_call.1} parent=23 // pred_fallthru
          _
      $region24: #{tpu_custom_call.1} parent=5 // pred_fallthru
        _
      %p648 = scmp.le.s32.totalorder 2, %s12
      // Predicated region
      $region33: #{tpu_custom_call.1} parent=5 // pred_check
        %p649 = pneg %p648
      $region34: #{tpu_custom_call.1} parent=5 // pred_check_branch
        %651 = sbr.rel (%p649) target = $region36
      $region35: #{tpu_custom_call.1} parent=5 // pred_region
        %s652 = ssub.s32 %s12, 2
        // Predicated region
        $region37: #{tpu_custom_call.1} parent=35 // pred_check
          %p653 = pneg %p83
        $region38: #{tpu_custom_call.1} parent=35 // pred_check_branch
          %655 = sbr.rel (%p653) target = $region40
        $region39: #{tpu_custom_call.1} parent=35 // pred_region
          %s656 = smul.u32 2, %s24
          %p657 = scmp.lt.s32.totalorder %s23, 1
          %s658 = scalar_select %p657, %s23, 1
          %p659 = scmp.lt.s32.totalorder %s656, 1
          %s660 = scalar_select %p659, %s656, 1
          %s661 = smul.addr %s658, 2
          %s662 = sadd.s32 %s660, %s661
          %s663 = smul.addr %s662, 4
          %s664 = scalar_lea.vmem %s1, %s663
        $region40: #{tpu_custom_call.1} parent=35 // pred_fallthru
          _
        // Predicated region
        $region41: #{tpu_custom_call.1} parent=35 // pred_check
          %p665 = pneg %p111
        $region42: #{tpu_custom_call.1} parent=35 // pred_check_branch
          %667 = sbr.rel (%p665) target = $region44
        $region43: #{tpu_custom_call.1} parent=35 // pred_region
          %s668 = sand.u32 %s96, 1
          %s669 = scalar_lea.sflag [#allocation3], %s668
          %s670 = sand.u32 %s96, 1
          %s671 = smul.addr %s670, 2
          %s672 = scalar_lea.vmem [#allocation2], %s671
          %673 = dma.done %s669, 32
        $region44: #{tpu_custom_call.1} parent=35 // pred_fallthru
          _
      $region36: #{tpu_custom_call.1} parent=5 // pred_fallthru
        _
    $region6: #{tpu_custom_call.1} parent=1 // loop_footer
      %s16 = sadd.s32 1, %s12
    $region7: #{tpu_custom_call.1} parent=1 // loop_footer_branch
      %11 = sbr.rel target = $region3
    $region8: #{tpu_custom_call.1} parent=1 // loop_exit
      _
    %674 = vsyncpa [#allocation3], 1
    %s675 = scalar_lea.sflag [#allocation3], 1
    %676 = vsyncpa %s675, 1

</llo_original>
